<compile_context>
chip_gen: v6e
topology: v6e:2x2x1
jax: 0.10.0
libtpu: 0.0.40
codegen_flags: <defaults>
</compile_context>

<pallas_src>
import math

import jax
import jax.numpy as jnp
from jax.experimental import pallas as pl
from jax.experimental.pallas import tpu as pltpu


# ---------------------------------------------------------------------------
# In-kernel sine: Cody-Waite range reduction + odd polynomial (VALU-friendly).
# ---------------------------------------------------------------------------
_INV_PI = 0.3183098861837907
_DP1 = 3.140625                      # pi split: high part (exact in few bits)
_DP2 = 9.6765358979311599e-04        # pi - _DP1 (f32-rounded remainder)

# Odd-series coefficients (r^3, r^5, ... ordered highest-degree first for Horner).
_SIN_COEFFS_F32 = (
    -2.5052108385441720e-08,   # r^11
    2.7557319223985893e-06,    # r^9
    -1.9841269841269841e-04,   # r^7
    8.3333333333333333e-03,    # r^5
    -1.6666666666666666e-01,   # r^3
)
_SIN_COEFFS_LOWP = (           # enough for bf16 / f16 outputs
    -1.9841269841269841e-04,   # r^7
    8.3333333333333333e-03,    # r^5
    -1.6666666666666666e-01,   # r^3
)


def _sin_f32(y, coeffs):
    """sin(y) for f32 y.  y = k*pi + r, |r| <= pi/2, sin(y) = (-1)^k * sin(r)."""
    k = jnp.floor(y * _INV_PI + 0.5)           # nearest integer multiple of pi
    r = y - k * _DP1                           # two-term Cody-Waite reduction (f32)
    r = r - k * _DP2
    r2 = r * r
    p = r2 * coeffs[0] + coeffs[1]             # Horner over odd coefficients
    for c in coeffs[2:]:
        p = p * r2 + c
    s = r + r * (r2 * p)                       # sin(r)
    parity = k - 2.0 * jnp.floor(k * 0.5)      # 0.0 or 1.0 (k exact integer-valued)
    return s * (1.0 - 2.0 * parity)            # (-1)^k * sin(r)


def _sin_kernel(freq_ref, x_ref, o_ref):
    # Elementwise hot path: mul + range-reduce + short polynomial on the VPU.
    # Compute in f32 (range reduction must be f32 even for bf16 I/O: |freq*x| >> pi).
    x = x_ref[...].astype(jnp.float32)
    f = freq_ref[...].astype(jnp.float32)        # (1, W) broadcast over sublanes
    if jnp.dtype(o_ref.dtype).itemsize >= 4:
        coeffs = _SIN_COEFFS_F32                 # full accuracy for f32 outputs
    else:
        coeffs = _SIN_COEFFS_LOWP                # shorter poly is plenty for bf16/f16
    o_ref[...] = _sin_f32(f * x, coeffs).astype(o_ref.dtype)


# ---------------------------------------------------------------------------
# Wrapper-side shape / tiling heuristics.
# ---------------------------------------------------------------------------
def _tpu_generation():
    """Best-effort TPU generation (5/6/7); conservative default if unknown."""
    try:
        kind = jax.devices()[0].device_kind.lower()
    except Exception:
        return 6
    for g in (7, 6, 5, 4, 3):
        if ("v%d" % g) in kind:
            return g
    return 6


def _choose_fold(rows, d, target_lanes=1024, max_lanes=8192):
    """Fold factor F (F | rows) so the flattened last dim W = d*F is lane-dense.

    Prefers W that is a multiple of 128 closest to ~1024 lanes (unmasked vst);
    otherwise the W >= 128 closest to the target; otherwise the widest available.
    """
    if d % 128 == 0:
        return 1                                    # already lane-dense
    divs = set()
    i = 1
    while i * i <= rows:                            # O(sqrt(rows)) at trace time
        if rows % i == 0:
            divs.add(i)
            divs.add(rows // i)
        i += 1
    best_f, best_key = 1, None
    for f in sorted(divs):
        w = d * f
        if w > max_lanes:
            continue
        if w % 128 == 0:
            key = (0, abs(w - target_lanes))        # best: unmasked multiple of 128
        elif w >= 128:
            key = (1, abs(w - target_lanes))        # wide, mostly-unmasked stores
        else:
            key = (2, -w)                           # last resort: widest narrow slab
        if best_key is None or key < best_key:
            best_key, best_f = key, f
    return best_f


def _choose_tile_rows(rows, w, itemsize, *, target_bytes, min_grid):
    """Sublane-aligned row tile near `target_bytes`, keeping >= min_grid steps."""
    if rows <= 8:
        return rows
    tr = max(8, (target_bytes // max(1, w * itemsize)) // 8 * 8)
    cap = max(8, pl.cdiv(pl.cdiv(rows, min_grid), 8) * 8)
    tr = min(tr, cap)
    if tr >= rows:
        return rows          # single block covering the full first dim (no masking)
    return tr


def sin_pallas(x, freq):
    """y = sin(freq * x).  x: (..., dim), freq: (1, dim) or (dim,)."""
    d = x.shape[-1]
    rows = math.prod(x.shape[:-1]) if x.ndim > 1 else 1
    x2 = x.reshape(rows, d)
    freq2 = jnp.asarray(freq).reshape(1, d)

    # Lane-densify: fold rows into the lane axis (row-major reshape keeps semantics;
    # freq is tiled along the new, wider lane axis).
    fold = _choose_fold(rows, d)
    if fold > 1:
        rows //= fold
        d_eff = d * fold
        x2 = x2.reshape(rows, d_eff)
        freq2 = jnp.tile(freq2, (1, fold))
    else:
        d_eff = d

    gen = _tpu_generation()
    target_bytes = (2 << 20) if gen <= 5 else (4 << 20)   # v5e scoped-VMEM headroom
    min_grid = 4 if gen >= 7 else 2                       # 2 TCs on v7x, 1 otherwise
    itemsize = jnp.dtype(x.dtype).itemsize
    tr = _choose_tile_rows(rows, d_eff, itemsize,
                           target_bytes=target_bytes, min_grid=min_grid)

    grid_n = pl.cdiv(rows, tr)
    if gen >= 7 and grid_n > 1 and grid_n % 2 == 1:
        # Even step count so both v7x TensorCores stay busy through the tail.
        tr = max(8, pl.cdiv(pl.cdiv(rows, grid_n + 1), 8) * 8)
        grid_n = pl.cdiv(rows, tr)

    out = pl.pallas_call(
        _sin_kernel,
        out_shape=jax.ShapeDtypeStruct((rows, d_eff), x.dtype),
        grid_spec=pltpu.PrefetchScalarGridSpec(
            num_scalar_prefetch=0,
            grid=(grid_n,),
            in_specs=[
                pl.BlockSpec((1, d_eff), lambda i: (0, 0)),     # freq (tiny, resident)
                pl.BlockSpec((tr, d_eff), lambda i: (i, 0)),    # x row tile
            ],
            out_specs=pl.BlockSpec((tr, d_eff), lambda i: (i, 0)),
        ),
        compiler_params=pltpu.CompilerParams(
            dimension_semantics=("parallel",),
        ),
    )(freq2, x2)

    return out.reshape(x.shape)


def sin_ref(x, freq):
    return jnp.sin(jnp.asarray(freq).reshape(1, x.shape[-1]) * x)


if __name__ == "__main__":
    key = jax.random.PRNGKey(0)
    # Small shapes consistent with the module: (batch=2, seq=8, dim=32),
    # freq = w * ones(1, dim) (the Sin.freq parameter at init).
    dim = 32
    w = 10.0
    x = jax.random.normal(key, (2, 8, dim), dtype=jnp.float32)
    freq = w * jnp.ones((1, dim), dtype=jnp.float32)

    y = sin_pallas(x, freq)
    jax.block_until_ready(y)

    y_ref = sin_ref(x, freq)
    assert y.shape == x.shape and y.dtype == x.dtype
    assert jnp.allclose(y, y_ref, atol=1e-5, rtol=1e-5), "mismatch vs reference"

    print("KERNEL_OK")
</pallas_src>

<mosaic_0001>
module attributes {stable_mosaic.version = 11 : i64} {
  func.func @_sin_kernel(%arg0: i32, %arg1: memref<1x512xf32, #tpu.memory_space<vmem>>, %arg2: memref<1x512xf32, #tpu.memory_space<vmem>>, %arg3: memref<1x512xf32, #tpu.memory_space<vmem>>) attributes {dimension_semantics = [#tpu.dimension_semantics<parallel>], iteration_bounds = array<i64: 1>, scalar_prefetch = 0 : i64, scratch_operands = 0 : i64, tpu.core_type = #tpu.core_type<tc>, window_params = [{pipeline_mode = #tpu.pipeline_mode<synchronous>, transform_indices = @transform_0, window_bounds = array<i64: 1, 512>}, {transform_indices = @transform_1, window_bounds = array<i64: 1, 512>}, {transform_indices = @transform_2, window_bounds = array<i64: 1, 512>}]} {
    %c0 = arith.constant 0 : index
    %c0_0 = arith.constant 0 : index
    %0 = vector.load %arg2[%c0, %c0_0] : memref<1x512xf32, #tpu.memory_space<vmem>>, vector<1x512xf32>
    %c0_1 = arith.constant 0 : index
    %c0_2 = arith.constant 0 : index
    %1 = vector.load %arg1[%c0_1, %c0_2] : memref<1x512xf32, #tpu.memory_space<vmem>>, vector<1x512xf32>
    %2 = arith.mulf %1, %0 : vector<1x512xf32>
    %cst = arith.constant 0.318309873 : f32
    %3 = vector.broadcast %cst : f32 to vector<1x512xf32>
    %4 = arith.mulf %2, %3 : vector<1x512xf32>
    %cst_3 = arith.constant 5.000000e-01 : f32
    %5 = vector.broadcast %cst_3 : f32 to vector<1x512xf32>
    %6 = arith.addf %4, %5 : vector<1x512xf32>
    %7 = math.floor %6 : vector<1x512xf32>
    %cst_4 = arith.constant 3.140625 : f32
    %8 = vector.broadcast %cst_4 : f32 to vector<1x512xf32>
    %9 = arith.mulf %7, %8 : vector<1x512xf32>
    %10 = arith.subf %2, %9 : vector<1x512xf32>
    %cst_5 = arith.constant 9.67653584E-4 : f32
    %11 = vector.broadcast %cst_5 : f32 to vector<1x512xf32>
    %12 = arith.mulf %7, %11 : vector<1x512xf32>
    %13 = arith.subf %10, %12 : vector<1x512xf32>
    %14 = arith.mulf %13, %13 : vector<1x512xf32>
    %cst_6 = arith.constant -2.50521079E-8 : f32
    %15 = vector.broadcast %cst_6 : f32 to vector<1x512xf32>
    %16 = arith.mulf %14, %15 : vector<1x512xf32>
    %cst_7 = arith.constant 2.75573188E-6 : f32
    %17 = vector.broadcast %cst_7 : f32 to vector<1x512xf32>
    %18 = arith.addf %16, %17 : vector<1x512xf32>
    %19 = arith.mulf %18, %14 : vector<1x512xf32>
    %cst_8 = arith.constant -1.98412701E-4 : f32
    %20 = vector.broadcast %cst_8 : f32 to vector<1x512xf32>
    %21 = arith.addf %19, %20 : vector<1x512xf32>
    %22 = arith.mulf %21, %14 : vector<1x512xf32>
    %cst_9 = arith.constant 0.00833333377 : f32
    %23 = vector.broadcast %cst_9 : f32 to vector<1x512xf32>
    %24 = arith.addf %22, %23 : vector<1x512xf32>
    %25 = arith.mulf %24, %14 : vector<1x512xf32>
    %cst_10 = arith.constant -0.166666672 : f32
    %26 = vector.broadcast %cst_10 : f32 to vector<1x512xf32>
    %27 = arith.addf %25, %26 : vector<1x512xf32>
    %28 = arith.mulf %14, %27 : vector<1x512xf32>
    %29 = arith.mulf %13, %28 : vector<1x512xf32>
    %30 = arith.addf %13, %29 : vector<1x512xf32>
    %cst_11 = arith.constant 5.000000e-01 : f32
    %31 = vector.broadcast %cst_11 : f32 to vector<1x512xf32>
    %32 = arith.mulf %7, %31 : vector<1x512xf32>
    %33 = math.floor %32 : vector<1x512xf32>
    %cst_12 = arith.constant 2.000000e+00 : f32
    %34 = vector.broadcast %cst_12 : f32 to vector<1x512xf32>
    %35 = arith.mulf %34, %33 : vector<1x512xf32>
    %36 = arith.subf %7, %35 : vector<1x512xf32>
    %cst_13 = arith.constant 2.000000e+00 : f32
    %37 = vector.broadcast %cst_13 : f32 to vector<1x512xf32>
    %38 = arith.mulf %37, %36 : vector<1x512xf32>
    %cst_14 = arith.constant 1.000000e+00 : f32
    %39 = vector.broadcast %cst_14 : f32 to vector<1x512xf32>
    %40 = arith.subf %39, %38 : vector<1x512xf32>
    %41 = arith.mulf %30, %40 : vector<1x512xf32>
    %c0_15 = arith.constant 0 : index
    %c0_16 = arith.constant 0 : index
    %42 = vector.load %arg3[%c0_15, %c0_16] : memref<1x512xf32, #tpu.memory_space<vmem>>, vector<1x512xf32>
    tpu.vector_store %arg3[%c0_15, %c0_16], %41 {strides = array<i32>} : memref<1x512xf32, #tpu.memory_space<vmem>>, vector<1x512xf32>,
    return
  }
  func.func @transform_0(%arg0: i32) -> (i32, i32) {
    %c0_i32 = arith.constant 0 : i32
    %c0_i32_0 = arith.constant 0 : i32
    %c0_i32_1 = arith.constant 0 : i32
    return %c0_i32, %c0_i32_0 : i32, i32
  }
  func.func @transform_1(%arg0: i32) -> (i32, i32) {
    %c0_i32 = arith.constant 0 : i32
    %c0_i32_0 = arith.constant 0 : i32
    return %arg0, %c0_i32 : i32, i32
  }
  func.func @transform_2(%arg0: i32) -> (i32, i32) {
    %c0_i32 = arith.constant 0 : i32
    %c0_i32_0 = arith.constant 0 : i32
    return %arg0, %c0_i32 : i32, i32
  }
}

</mosaic_0001>

<llo_original>
// kernel: tpu_custom_call.1
$region0: #{tpu_custom_call.1}
  #allocation0 [shape = 'u32[]', space=smem, size = 0x4, offset = 0x4, fixed_abs, tag = 'smem constant byte address 0x4 - core index']
  #allocation1 [shape = 'u32[144,128]{1,0:T(1,128)}', space=vmem, size = 0x12000, scoped, tag = 'internal scratch']
  %s0 = inlined_call_operand.hbm [shape: f32[1,512], index: 0, kind: input, shape index: {}]
  %s1 = inlined_call_operand.hbm [shape: f32[1,512], index: 1, kind: input, shape index: {}]
  %s2 = inlined_call_operand.hbm [shape: f32[1,512], index: 2, kind: output, shape index: {}]
  %s3 = sld [smem:[#allocation0]]
  $region26: #{tpu_custom_call.1} parent=0
    _
  %s5 = ssub.s32 1, %s3
  %s6 = scalar_select 0, %s5, %s3
  $region1: #{tpu_custom_call.1} parent=0
    #allocation2 [shape = 'u8[2048]{0}', space=vmem, size = 0x800, scoped, tag = 'input window, operand 0, single buffered']
    #allocation3 [shape = 's32[1]{0}', space=sflag, size = 0x4, scoped, tag = 'scoped memory for tpu_custom_call.1']
    #allocation4 [shape = 's32[1]{0}', space=sflag, size = 0x4, scoped, tag = 'scoped memory for tpu_custom_call.1']
    #allocation5 [shape = 'u8[2048]{0}', space=vmem, size = 0x800, scoped, tag = 'input window, operand 1, single buffered']
    #allocation6 [shape = 's32[1]{0}', space=sflag, size = 0x4, scoped, tag = 'scoped memory for tpu_custom_call.1']
    #allocation7 [shape = 'u8[2048]{0}', space=vmem, size = 0x800, scoped, tag = 'output window, operand 0, single buffered']
    %7 = vsyncpa [#allocation3], 0
    %8 = vsyncpa [#allocation6], 0
    %9 = vsyncpa [#allocation4], 0
    // Predicated region
    $region2: #{tpu_custom_call.1} parent=1 // pred_check
      _
    $region3: #{tpu_custom_call.1} parent=1 // pred_check_branch
      %11 = sbr.rel (0) target = $region5
    $region4: #{tpu_custom_call.1} parent=1 // pred_region
      %s13 = ssub.s32 64, 64
      %14 = vsyncadd [#allocation3], %s13
      %s16 = sshll.u32 [#allocation2], 4
      %s17 = int_to_ptr.vmem [resolvable:$true] %s16
      %19 = dma.hbm_to_vmem [thread:$0]  %s0, 64, %s17, [#allocation3]
    $region5: #{tpu_custom_call.1} parent=1 // pred_fallthru
      _
    // Predicated region
    $region6: #{tpu_custom_call.1} parent=1 // pred_check
      _
    $region7: #{tpu_custom_call.1} parent=1 // pred_check_branch
      %21 = sbr.rel (0) target = $region9
    $region8: #{tpu_custom_call.1} parent=1 // pred_region
      %s23 = ssub.s32 64, 64
      %24 = vsyncadd [#allocation6], %s23
      %s26 = sshll.u32 [#allocation5], 4
      %s27 = int_to_ptr.vmem [resolvable:$true] %s26
      %29 = dma.hbm_to_vmem [thread:$0]  %s1, 64, %s27, [#allocation6]
    $region9: #{tpu_custom_call.1} parent=1 // pred_fallthru
      _
    // Predicated region
    $region10: #{tpu_custom_call.1} parent=1 // pred_check
      _
    $region11: #{tpu_custom_call.1} parent=1 // pred_check_branch
      %31 = sbr.rel (0) target = $region13
    $region12: #{tpu_custom_call.1} parent=1 // pred_region
      %32 = dma.done [#allocation3], 64
    $region13: #{tpu_custom_call.1} parent=1 // pred_fallthru
      _
    // Predicated region
    $region14: #{tpu_custom_call.1} parent=1 // pred_check
      _
    $region15: #{tpu_custom_call.1} parent=1 // pred_check_branch
      %34 = sbr.rel (0) target = $region17
    $region16: #{tpu_custom_call.1} parent=1 // pred_region
      %35 = dma.done [#allocation6], 64
    $region17: #{tpu_custom_call.1} parent=1 // pred_fallthru
      _
    %v36 = vld [vmem:[#allocation5] sm:$0xf]
    %v37 = vld [vmem:[#allocation2] sm:$0xf]
    %v38 = vmul.f32 %v37, %v36
    %v39 = vmul.f32 %v38, 0.31830987
    %v40 = vadd.f32 %v39, 0.5
    %v41 = vfloor.f32 %v40
    %v42 = vmul.f32 %v41, 3.140625
    %v43 = vsub.f32 %v38, %v42
    %v44 = vmul.f32 %v41, 0.0009676536
    %v45 = vsub.f32 %v43, %v44
    %v46 = vmul.f32 %v45, %v45
    %v47 = vmul.f32 %v46, -2.5052108e-08
    %v48 = vadd.f32 %v47, 2.7557319e-06
    %v49 = vmul.f32 %v48, %v46
    %v50 = vadd.f32 %v49, -0.0001984127
    %v51 = vmul.f32 %v50, %v46
    %v52 = vadd.f32 %v51, 0.008333334
    %v53 = vmul.f32 %v52, %v46
    %v54 = vadd.f32 %v53, -0.16666667
    %v55 = vmul.f32 %v46, %v54
    %v56 = vmul.f32 %v45, %v55
    %v57 = vadd.f32 %v45, %v56
    %v58 = vmul.f32 %v41, 0.5
    %v59 = vfloor.f32 %v58
    %v60 = vmul.f32 %v59, 2.0
    %v61 = vsub.f32 %v41, %v60
    %v62 = vmul.f32 %v61, 2.0
    %v63 = vsub.f32 1.0, %v62
    %v64 = vmul.f32 %v57, %v63
    %v65 = vlaneseq
    %vm66 = vcmp.ge.s32.totalorder %v65, 0
    %vm67 = vcmp.lt.s32.totalorder %v65, 512
    %vm68 = vmand %vm66, %vm67
    %69 = vst.msk [vmem:[#allocation7] sm:$0xf] %vm68, %v64
    // Predicated region
    $region18: #{tpu_custom_call.1} parent=1 // pred_check
      _
    $region19: #{tpu_custom_call.1} parent=1 // pred_check_branch
      %71 = sbr.rel (0) target = $region21
    $region20: #{tpu_custom_call.1} parent=1 // pred_region
      %s73 = ssub.s32 64, 64
      %74 = vsyncadd [#allocation4], %s73
      %s76 = sshll.u32 [#allocation7], 4
      %s77 = int_to_ptr.vmem [resolvable:$true] %s76
      %79 = dma.vmem_to_hbm [thread:$0]  %s77, 64, %s2, [#allocation4]
    $region21: #{tpu_custom_call.1} parent=1 // pred_fallthru
      _
    // Predicated region
    $region22: #{tpu_custom_call.1} parent=1 // pred_check
      _
    $region23: #{tpu_custom_call.1} parent=1 // pred_check_branch
      %81 = sbr.rel (0) target = $region25
    $region24: #{tpu_custom_call.1} parent=1 // pred_region
      %82 = dma.done [#allocation4], 64
    $region25: #{tpu_custom_call.1} parent=1 // pred_fallthru
      _
    %83 = vsyncpa [#allocation3], 1
    %84 = vsyncpa [#allocation6], 1
    %85 = vsyncpa [#allocation4], 1

</llo_original>
